<compile_context>
chip_gen: v6e
topology: v6e:2x2x1
jax: 0.10.0
libtpu: 0.0.40
codegen_flags: <defaults>
</compile_context>

<pallas_src>
import math

import jax
import jax.numpy as jnp
from jax.experimental import pallas as pl
from jax.experimental.pallas import tpu as pltpu


def _round_up(x, m):
    return ((x + m - 1) // m) * m


def _choose_tile(m, max_tile, min_steps=4):
    """Lane tile for the matmul spatial dim M.

    * multiple of 128 (lane width) -> dense, unmasked stores,
    * >= min_steps grid steps so the "parallel" axis can shard across v7x's 2 TCs,
    * capped at max_tile so each step moves ~1-2 MiB (amortizes ~0.35 us/step
      pipeline overhead) without pressuring scoped VMEM,
    * derived from ceil(M / min_steps) so round_up(M, tile) padding wastes < 1 tile.
    """
    tile = _round_up(max(1, math.ceil(m / min_steps)), 128)
    tile = max(128, min(tile, max_tile))
    return tile, _round_up(m, tile)


# ----------------------------------------------------------------------------
# Kernel 1: enc1 = ReLU(W1^T @ patches^T + b1)   (Conv2d 1->16, k3 s2 p1)
# ----------------------------------------------------------------------------
def _enc1_kernel(p_ref, w_ref, b_ref, o_ref):
    # p: (9, TM) bf16   w: (16, 9) f32   b: (16, 1) f32   o: (16, TM) bf16
    p = p_ref[...].astype(jnp.float32)            # f32 MXU operands (no bf16 dots)
    acc = jnp.dot(w_ref[...], p, preferred_element_type=jnp.float32)
    acc = jnp.maximum(acc + b_ref[...], 0.0)
    o_ref[...] = acc.astype(o_ref.dtype)


def _enc1_call(p1, w1t, b1, tile):
    K, Mp = p1.shape
    C = w1t.shape[0]
    return pl.pallas_call(
        _enc1_kernel,
        out_shape=jax.ShapeDtypeStruct((C, Mp), jnp.bfloat16),
        grid=(Mp // tile,),
        in_specs=[
            pl.BlockSpec((K, tile), lambda i: (0, i)),   # K=9 full-extent leading dim
            pl.BlockSpec((C, K), lambda i: (0, 0)),
            pl.BlockSpec((C, 1), lambda i: (0, 0)),
        ],
        out_specs=pl.BlockSpec((C, tile), lambda i: (0, i)),
        compiler_params=pltpu.CompilerParams(dimension_semantics=("parallel",)),
    )(p1, w1t, b1)


# ----------------------------------------------------------------------------
# Kernel 2: fused enc2 (Conv2d 16->32) -> dec1 (ConvT 32->16) -> dec2 (ConvT 16->1)
# Intermediates stay in vregs/VMEM; only the final sigmoid output hits HBM.
# Constants are packed into one weight slab + one bias column (3 in_specs total).
# ----------------------------------------------------------------------------
def _enc2_dec_kernel(p_ref, w_ref, b_ref, o_ref):
    # p: (144, TM) bf16 enc1-output patches (rows = ci*9 + ki*3 + kj)
    # w: (112, 144) f32 packed:
    #      rows   0:32 , cols 0:144 -> enc2  W^T (32, 144)
    #      rows  32:96 , cols 0:32  -> dec1  W^T (64, 32),  row t = co*4 + a*2 + b
    #      rows  96:112, cols 0:64  -> dec2  W^T (16, 64),  row u = (2a+c)*4 + (2b+d)
    # b: (112, 1) f32 packed biases with the same row split.
    x = p_ref[...].astype(jnp.float32)                                        # (144, TM)
    h = jnp.dot(w_ref[0:32, 0:144], x, preferred_element_type=jnp.float32)    # (32, TM)
    h = jnp.maximum(h + b_ref[0:32, :], 0.0)                                  # enc2 + ReLU
    g = jnp.dot(w_ref[32:96, 0:32], h, preferred_element_type=jnp.float32)    # (64, TM)
    g = jnp.maximum(g + b_ref[32:96, :], 0.0)                                 # dec1 + ReLU
    y = jnp.dot(w_ref[96:112, 0:64], g, preferred_element_type=jnp.float32)   # (16, TM)
    y = y + b_ref[96:112, :]
    # Sigmoid: exp goes to the EUP; the divide stays on the VALU (cheap while the
    # kernel is HBM-bound; pl.reciprocal(approx=True) would move it to the EUP too).
    y = 1.0 / (1.0 + jnp.exp(-y))
    o_ref[...] = y


def _enc2_dec_call(p2, wk, bk, tile):
    K, Mp = p2.shape
    return pl.pallas_call(
        _enc2_dec_kernel,
        out_shape=jax.ShapeDtypeStruct((16, Mp), jnp.float32),
        grid=(Mp // tile,),
        in_specs=[
            pl.BlockSpec((K, tile), lambda i: (0, i)),
            pl.BlockSpec(wk.shape, lambda i: (0, 0)),
            pl.BlockSpec(bk.shape, lambda i: (0, 0)),
        ],
        out_specs=pl.BlockSpec((16, tile), lambda i: (0, i)),
        compiler_params=pltpu.CompilerParams(
            dimension_semantics=("parallel",),
            # Double-buffered (144, 8192) bf16 in + (16, 8192) f32 out ~ 5.5 MiB;
            # raise the scoped-VMEM ceiling so v5e's 16 MiB default never binds.
            vmem_limit_bytes=32 * 1024 * 1024,
        ),
    )(p2, wk, bk)


# ----------------------------------------------------------------------------
# Forward pass
# ----------------------------------------------------------------------------
@jax.jit
def denoising_autoencoder_forward(params, x):
    """x: (N, 1, H, W) float32 with H, W divisible by 4 (exact round trip)."""
    N, Cin, H, W = x.shape
    assert Cin == 1 and H % 4 == 0 and W % 4 == 0
    H2, W2, H4, W4 = H // 2, W // 2, H // 4, W // 4

    # ----------------- enc1: Conv2d(1->16, k3 s2 p1) + ReLU -----------------
    xb = x[:, 0].astype(jnp.bfloat16)                        # (N, H, W)
    xp = jnp.pad(xb, ((0, 0), (1, 1), (1, 1)))
    # im2col^T: rows = kernel tap ki*3+kj, cols = spatial (n, ho, wo)
    taps = [xp[:, i:i + 2 * H2:2, j:j + 2 * W2:2] for i in range(3) for j in range(3)]
    M1 = N * H2 * W2
    tile1, M1p = _choose_tile(M1, max_tile=16384)
    p1 = jnp.stack(taps, axis=0).reshape(9, M1)              # K stays 9 (no HBM padding)
    p1 = jnp.pad(p1, ((0, 0), (0, M1p - M1)))

    w1t = params["enc1_w"].reshape(16, 9).astype(jnp.float32)
    b1 = params["enc1_b"].reshape(16, 1).astype(jnp.float32)

    e1 = _enc1_call(p1, w1t, b1, tile1)                      # (16, M1p) bf16
    e1 = e1[:, :M1].reshape(16, N, H2, W2)                   # channel-major, lane-dense

    # ----- enc2 patches^T: rows ordered (ci, ki, kj) = ci*9 + ki*3 + kj -----
    e1p = jnp.pad(e1, ((0, 0), (0, 0), (1, 1), (1, 1)))      # zero-pad enc1 output (pad=1)
    taps2 = [e1p[:, :, i:i + 2 * H4:2, j:j + 2 * W4:2] for i in range(3) for j in range(3)]
    M2 = N * H4 * W4
    tile2, M2p = _choose_tile(M2, max_tile=8192)
    p2 = jnp.stack(taps2, axis=1).reshape(144, M2)
    p2 = jnp.pad(p2, ((0, 0), (0, M2p - M2)))

    # ----- pack all fused-kernel constants into one weight slab + one bias column -----
    w2t = params["enc2_w"].reshape(32, 144)                  # enc2, (32, 144)
    w3t = params["dec1_w"].reshape(32, 64).T                 # dec1, (64, 32), t = co*4+a*2+b
    # dec2 (ConvTranspose2d 16->1, k2 s2) folded into a block matmul over dec1's fused
    # output: rows t = co*4 + a*2 + b, cols u = (2a+c)*4 + (2b+d)
    w2d = params["dec2_w"][:, 0]                             # (16, 2, 2) = [co, c, d]
    blk = jnp.zeros((16, 2, 2, 4, 4), jnp.float32)
    blk = blk.at[:, 0, 0, 0:2, 0:2].set(w2d)
    blk = blk.at[:, 0, 1, 0:2, 2:4].set(w2d)
    blk = blk.at[:, 1, 0, 2:4, 0:2].set(w2d)
    blk = blk.at[:, 1, 1, 2:4, 2:4].set(w2d)
    w4t = blk.reshape(64, 16).T                              # (16, 64)

    wk = jnp.zeros((112, 144), jnp.float32)
    wk = wk.at[0:32, 0:144].set(w2t.astype(jnp.float32))
    wk = wk.at[32:96, 0:32].set(w3t.astype(jnp.float32))
    wk = wk.at[96:112, 0:64].set(w4t)

    bk = jnp.concatenate([
        params["enc2_b"].reshape(32),
        jnp.repeat(params["dec1_b"], 4),                     # rows t = co*4 + a*2 + b
        jnp.broadcast_to(params["dec2_b"], (16,)),
    ]).reshape(112, 1).astype(jnp.float32)

    y = _enc2_dec_call(p2, wk, bk, tile2)                    # (16, M2p) f32
    # rows u = (2a+c)*4 + (2b+d): pixel-shuffle each enc2 pixel's 4x4 block into (H, W)
    y = y[:, :M2].reshape(4, 4, N, H4, W4)                   # (row, col, n, i, j)
    y = y.transpose(2, 3, 0, 4, 1).reshape(N, H, W)
    return y[:, None, :, :]                                  # (N, 1, H, W)


# ----------------------------------------------------------------------------
# Params (PyTorch-style uniform init, matching module shapes)
# ----------------------------------------------------------------------------
def init_params(key):
    def uniform(k, shape, fan_in):
        bound = 1.0 / jnp.sqrt(fan_in)
        return jax.random.uniform(k, shape, jnp.float32, -bound, bound)

    ks = jax.random.split(key, 8)
    return {
        # Conv2d(1, 16, 3, stride=2, padding=1)
        "enc1_w": uniform(ks[0], (16, 1, 3, 3), 1 * 9),
        "enc1_b": uniform(ks[1], (16,), 1 * 9),
        # Conv2d(16, 32, 3, stride=2, padding=1)
        "enc2_w": uniform(ks[2], (32, 16, 3, 3), 16 * 9),
        "enc2_b": uniform(ks[3], (32,), 16 * 9),
        # ConvTranspose2d(32, 16, 2, stride=2) -> weight (Cin=32, Cout=16, 2, 2)
        "dec1_w": uniform(ks[4], (32, 16, 2, 2), 32 * 4),
        "dec1_b": uniform(ks[5], (16,), 32 * 4),
        # ConvTranspose2d(16, 1, 2, stride=2) -> weight (Cin=16, Cout=1, 2, 2)
        "dec2_w": uniform(ks[6], (16, 1, 2, 2), 16 * 4),
        "dec2_b": uniform(ks[7], (1,), 16 * 4),
    }


# ----------------------------------------------------------------------------
# Plain-JAX f32 reference of the PyTorch module (sanity cross-check)
# ----------------------------------------------------------------------------
def _reference_forward(params, x):
    def conv(x, w, b):
        y = jax.lax.conv_general_dilated(
            x, w, window_strides=(2, 2), padding=((1, 1), (1, 1)),
            dimension_numbers=("NCHW", "OIHW", "NCHW"))
        return y + b[None, :, None, None]

    def convT(x, w, b):
        n, ci, h, ww = x.shape
        co = w.shape[1]
        y = jnp.einsum("nihw,iokl->nohkwl", x, w).reshape(n, co, 2 * h, 2 * ww)
        return y + b[None, :, None, None]

    h = jax.nn.relu(conv(x, params["enc1_w"], params["enc1_b"]))
    h = jax.nn.relu(conv(h, params["enc2_w"], params["enc2_b"]))
    h = jax.nn.relu(convT(h, params["dec1_w"], params["dec1_b"]))
    return jax.nn.sigmoid(convT(h, params["dec2_w"], params["dec2_b"]))


if __name__ == "__main__":
    key = jax.random.PRNGKey(0)
    pkey, xkey = jax.random.split(key)
    params = init_params(pkey)

    # Small deterministic input consistent with the module (1 input channel).
    x = jax.random.uniform(xkey, (2, 1, 16, 16), jnp.float32)

    out = denoising_autoencoder_forward(params, x)
    out = jax.block_until_ready(out)

    assert out.shape == (2, 1, 16, 16), out.shape
    assert out.dtype == jnp.float32
    assert bool(jnp.all(out >= 0.0)) and bool(jnp.all(out <= 1.0))  # sigmoid range

    # Cross-check against the f32 reference (bf16 image / e1 storage -> loose tolerance).
    ref = _reference_forward(params, x)
    max_err = float(jnp.max(jnp.abs(out - ref)))
    assert max_err < 5e-2, max_err

    print("KERNEL_OK")
</pallas_src>

<mosaic_0001>
module attributes {stable_mosaic.version = 11 : i64} {
  func.func @_enc1_kernel(%arg0: i32, %arg1: memref<9x128xbf16, #tpu.memory_space<vmem>>, %arg2: memref<16x9xf32, #tpu.memory_space<vmem>>, %arg3: memref<16x1xf32, #tpu.memory_space<vmem>>, %arg4: memref<16x128xbf16, #tpu.memory_space<vmem>>) attributes {dimension_semantics = [#tpu.dimension_semantics<parallel>], iteration_bounds = array<i64: 1>, scalar_prefetch = 0 : i64, scratch_operands = 0 : i64, tpu.core_type = #tpu.core_type<tc>, window_params = [{transform_indices = @transform_0, window_bounds = array<i64: 9, 128>}, {pipeline_mode = #tpu.pipeline_mode<synchronous>, transform_indices = @transform_1, window_bounds = array<i64: 16, 9>}, {pipeline_mode = #tpu.pipeline_mode<synchronous>, transform_indices = @transform_2, window_bounds = array<i64: 16, 1>}, {transform_indices = @transform_3, window_bounds = array<i64: 16, 128>}]} {
    %c0 = arith.constant 0 : index
    %c0_0 = arith.constant 0 : index
    %0 = vector.load %arg1[%c0, %c0_0] : memref<9x128xbf16, #tpu.memory_space<vmem>>, vector<9x128xbf16>
    %1 = arith.extf %0 : vector<9x128xbf16> to vector<9x128xf32>
    %c0_1 = arith.constant 0 : index
    %c0_2 = arith.constant 0 : index
    %2 = vector.load %arg2[%c0_1, %c0_2] : memref<16x9xf32, #tpu.memory_space<vmem>>, vector<16x9xf32>
    %cst = arith.constant dense<0.000000e+00> : vector<16x128xf32>
    %3 = tpu.matmul %2, %1, %cst {dimension_numbers = #tpu.dot_dimension_numbers<[1], [0], [0], [1], [0, 0, 1, 1], [], []>} : vector<16x9xf32>, vector<9x128xf32>, vector<16x128xf32> -> vector<16x128xf32>
    %c0_3 = arith.constant 0 : index
    %c0_4 = arith.constant 0 : index
    %4 = vector.load %arg3[%c0_3, %c0_4] : memref<16x1xf32, #tpu.memory_space<vmem>>, vector<16x1xf32>
    %5 = vector.broadcast %4 : vector<16x1xf32> to vector<16x128xf32>
    %6 = arith.addf %3, %5 : vector<16x128xf32>
    %cst_5 = arith.constant 0.000000e+00 : f32
    %7 = vector.broadcast %cst_5 : f32 to vector<16x128xf32>
    %8 = arith.maximumf %6, %7 : vector<16x128xf32>
    %9 = arith.truncf %8 : vector<16x128xf32> to vector<16x128xbf16>
    %c0_6 = arith.constant 0 : index
    %c0_7 = arith.constant 0 : index
    %10 = vector.load %arg4[%c0_6, %c0_7] : memref<16x128xbf16, #tpu.memory_space<vmem>>, vector<16x128xbf16>
    tpu.vector_store %arg4[%c0_6, %c0_7], %9 {strides = array<i32>} : memref<16x128xbf16, #tpu.memory_space<vmem>>, vector<16x128xbf16>,
    return
  }
  func.func @transform_0(%arg0: i32) -> (i32, i32) {
    %c0_i32 = arith.constant 0 : i32
    %c0_i32_0 = arith.constant 0 : i32
    return %c0_i32, %arg0 : i32, i32
  }
  func.func @transform_1(%arg0: i32) -> (i32, i32) {
    %c0_i32 = arith.constant 0 : i32
    %c0_i32_0 = arith.constant 0 : i32
    %c0_i32_1 = arith.constant 0 : i32
    return %c0_i32, %c0_i32_0 : i32, i32
  }
  func.func @transform_2(%arg0: i32) -> (i32, i32) {
    %c0_i32 = arith.constant 0 : i32
    %c0_i32_0 = arith.constant 0 : i32
    %c0_i32_1 = arith.constant 0 : i32
    return %c0_i32, %c0_i32_0 : i32, i32
  }
  func.func @transform_3(%arg0: i32) -> (i32, i32) {
    %c0_i32 = arith.constant 0 : i32
    %c0_i32_0 = arith.constant 0 : i32
    return %c0_i32, %arg0 : i32, i32
  }
}

module attributes {stable_mosaic.version = 11 : i64} {
  func.func @_enc2_dec_kernel(%arg0: i32, %arg1: memref<144x128xbf16, #tpu.memory_space<vmem>>, %arg2: memref<112x144xf32, #tpu.memory_space<vmem>>, %arg3: memref<112x1xf32, #tpu.memory_space<vmem>>, %arg4: memref<16x128xf32, #tpu.memory_space<vmem>>) attributes {dimension_semantics = [#tpu.dimension_semantics<parallel>], iteration_bounds = array<i64: 1>, scalar_prefetch = 0 : i64, scratch_operands = 0 : i64, tpu.core_type = #tpu.core_type<tc>, window_params = [{transform_indices = @transform_0, window_bounds = array<i64: 144, 128>}, {pipeline_mode = #tpu.pipeline_mode<synchronous>, transform_indices = @transform_1, window_bounds = array<i64: 112, 144>}, {pipeline_mode = #tpu.pipeline_mode<synchronous>, transform_indices = @transform_2, window_bounds = array<i64: 112, 1>}, {transform_indices = @transform_3, window_bounds = array<i64: 16, 128>}]} {
    %c0 = arith.constant 0 : index
    %c0_0 = arith.constant 0 : index
    %0 = vector.load %arg1[%c0, %c0_0] : memref<144x128xbf16, #tpu.memory_space<vmem>>, vector<144x128xbf16>
    %1 = arith.extf %0 : vector<144x128xbf16> to vector<144x128xf32>
    %c0_1 = arith.constant 0 : index
    %c0_2 = arith.constant 0 : index
    %2 = vector.load %arg2[%c0_1, %c0_2] : memref<112x144xf32, #tpu.memory_space<vmem>>, vector<32x144xf32>
    %cst = arith.constant dense<0.000000e+00> : vector<32x128xf32>
    %3 = tpu.matmul %2, %1, %cst {dimension_numbers = #tpu.dot_dimension_numbers<[1], [0], [0], [1], [0, 0, 1, 1], [], []>} : vector<32x144xf32>, vector<144x128xf32>, vector<32x128xf32> -> vector<32x128xf32>
    %c0_3 = arith.constant 0 : index
    %c0_4 = arith.constant 0 : index
    %4 = vector.load %arg3[%c0_3, %c0_4] : memref<112x1xf32, #tpu.memory_space<vmem>>, vector<32x1xf32>
    %5 = vector.broadcast %4 : vector<32x1xf32> to vector<32x128xf32>
    %6 = arith.addf %3, %5 : vector<32x128xf32>
    %cst_5 = arith.constant 0.000000e+00 : f32
    %7 = vector.broadcast %cst_5 : f32 to vector<32x128xf32>
    %8 = arith.maximumf %6, %7 : vector<32x128xf32>
    %c32 = arith.constant 32 : index
    %c0_6 = arith.constant 0 : index
    %9 = vector.load %arg2[%c32, %c0_6] : memref<112x144xf32, #tpu.memory_space<vmem>>, vector<64x32xf32>
    %cst_7 = arith.constant dense<0.000000e+00> : vector<64x128xf32>
    %10 = tpu.matmul %9, %8, %cst_7 {dimension_numbers = #tpu.dot_dimension_numbers<[1], [0], [0], [1], [0, 0, 1, 1], [], []>} : vector<64x32xf32>, vector<32x128xf32>, vector<64x128xf32> -> vector<64x128xf32>
    %c32_8 = arith.constant 32 : index
    %c0_9 = arith.constant 0 : index
    %11 = vector.load %arg3[%c32_8, %c0_9] : memref<112x1xf32, #tpu.memory_space<vmem>>, vector<64x1xf32>
    %12 = vector.broadcast %11 : vector<64x1xf32> to vector<64x128xf32>
    %13 = arith.addf %10, %12 : vector<64x128xf32>
    %cst_10 = arith.constant 0.000000e+00 : f32
    %14 = vector.broadcast %cst_10 : f32 to vector<64x128xf32>
    %15 = arith.maximumf %13, %14 : vector<64x128xf32>
    %c96 = arith.constant 96 : index
    %c0_11 = arith.constant 0 : index
    %16 = vector.load %arg2[%c96, %c0_11] : memref<112x144xf32, #tpu.memory_space<vmem>>, vector<16x64xf32>
    %cst_12 = arith.constant dense<0.000000e+00> : vector<16x128xf32>
    %17 = tpu.matmul %16, %15, %cst_12 {dimension_numbers = #tpu.dot_dimension_numbers<[1], [0], [0], [1], [0, 0, 1, 1], [], []>} : vector<16x64xf32>, vector<64x128xf32>, vector<16x128xf32> -> vector<16x128xf32>
    %c96_13 = arith.constant 96 : index
    %c0_14 = arith.constant 0 : index
    %18 = vector.load %arg3[%c96_13, %c0_14] : memref<112x1xf32, #tpu.memory_space<vmem>>, vector<16x1xf32>
    %19 = vector.broadcast %18 : vector<16x1xf32> to vector<16x128xf32>
    %20 = arith.addf %17, %19 : vector<16x128xf32>
    %cst_15 = arith.constant 0.000000e+00 : f32
    %21 = vector.broadcast %cst_15 : f32 to vector<16x128xf32>
    %22 = arith.subf %21, %20 : vector<16x128xf32>
    %23 = math.exp %22 : vector<16x128xf32>
    %cst_16 = arith.constant 1.000000e+00 : f32
    %24 = vector.broadcast %cst_16 : f32 to vector<16x128xf32>
    %25 = arith.addf %24, %23 : vector<16x128xf32>
    %cst_17 = arith.constant 1.000000e+00 : f32
    %26 = vector.broadcast %cst_17 : f32 to vector<16x128xf32>
    %27 = arith.divf %26, %25 : vector<16x128xf32>
    %c0_18 = arith.constant 0 : index
    %c0_19 = arith.constant 0 : index
    %28 = vector.load %arg4[%c0_18, %c0_19] : memref<16x128xf32, #tpu.memory_space<vmem>>, vector<16x128xf32>
    tpu.vector_store %arg4[%c0_18, %c0_19], %27 {strides = array<i32>} : memref<16x128xf32, #tpu.memory_space<vmem>>, vector<16x128xf32>,
    return
  }
  func.func @transform_0(%arg0: i32) -> (i32, i32) {
    %c0_i32 = arith.constant 0 : i32
    %c0_i32_0 = arith.constant 0 : i32
    return %c0_i32, %arg0 : i32, i32
  }
  func.func @transform_1(%arg0: i32) -> (i32, i32) {
    %c0_i32 = arith.constant 0 : i32
    %c0_i32_0 = arith.constant 0 : i32
    %c0_i32_1 = arith.constant 0 : i32
    return %c0_i32, %c0_i32_0 : i32, i32
  }
  func.func @transform_2(%arg0: i32) -> (i32, i32) {
    %c0_i32 = arith.constant 0 : i32
    %c0_i32_0 = arith.constant 0 : i32
    %c0_i32_1 = arith.constant 0 : i32
    return %c0_i32, %c0_i32_0 : i32, i32
  }
  func.func @transform_3(%arg0: i32) -> (i32, i32) {
    %c0_i32 = arith.constant 0 : i32
    %c0_i32_0 = arith.constant 0 : i32
    return %c0_i32, %arg0 : i32, i32
  }
}

</mosaic_0001>

<llo_original>
// kernel: denoising_autoencoder_forward.2
$region0: #{denoising_autoencoder_forward.2}
  #allocation0 [shape = 'u32[]', space=smem, size = 0x4, offset = 0x4, fixed_abs, tag = 'smem constant byte address 0x4 - core index']
  #allocation1 [shape = 'u32[144,128]{1,0:T(1,128)}', space=vmem, size = 0x12000, scoped, tag = 'internal scratch']
  %s0 = inlined_call_operand.vmem [shape: bf16[9,128], index: 0, kind: input, shape index: {}]
  %s1 = inlined_call_operand.vmem [shape: f32[16,9], index: 1, kind: input, shape index: {}]
  %s2 = inlined_call_operand.vmem [shape: f32[16,1], index: 2, kind: input, shape index: {}]
  %s3 = inlined_call_operand.vmem [shape: bf16[16,128], index: 3, kind: output, shape index: {}]
  %s4 = sld [smem:[#allocation0]]
  $region22: #{denoising_autoencoder_forward.2} parent=0
    _
  %s6 = ssub.s32 1, %s4
  %s7 = scalar_select 0, %s6, %s4
  // Predicated region
  $region2: #{denoising_autoencoder_forward.2} parent=0 // pred_check
    _
  $region3: #{denoising_autoencoder_forward.2} parent=0 // pred_check_branch
    %9 = sbr.rel (0) target = $region5
  $region4: #{denoising_autoencoder_forward.2} parent=0 // pred_region
    _
  $region5: #{denoising_autoencoder_forward.2} parent=0 // pred_fallthru
    _
  // Predicated region
  $region6: #{denoising_autoencoder_forward.2} parent=0 // pred_check
    _
  $region7: #{denoising_autoencoder_forward.2} parent=0 // pred_check_branch
    %11 = sbr.rel (0) target = $region9
  $region8: #{denoising_autoencoder_forward.2} parent=0 // pred_region
    _
  $region9: #{denoising_autoencoder_forward.2} parent=0 // pred_fallthru
    _
  // Predicated region
  $region10: #{denoising_autoencoder_forward.2} parent=0 // pred_check
    _
  $region11: #{denoising_autoencoder_forward.2} parent=0 // pred_check_branch
    %13 = sbr.rel (0) target = $region13
  $region12: #{denoising_autoencoder_forward.2} parent=0 // pred_region
    _
  $region13: #{denoising_autoencoder_forward.2} parent=0 // pred_fallthru
    _
  %v14 = vld [vmem:[%s0] sm:$0xf]
  %v15 = vld [vmem:[%s0 + $0x4] sm:$0x1]
  %v16 = vunpack.c.l.bf16 %v14
  %v17 = vunpack.c.l.bf16 %v15
  %v18 = vld [vmem:[%s1] sm:$0xff]
  %v19 = vld [vmem:[%s1 + $0x8] sm:$0xff]
  %v20 = vld [vmem:[%s2] sm:$0xff]
  %v21 = vld [vmem:[%s2 + $0x8] sm:$0xff]
  %23 = vset.pattern.permute.xlu0 0
  %24 = vperm.xlu0 %23, %v20
  %v25 = vpop.permute.xlu0 %24
  %28 = vset.pattern.permute.xlu0 0
  %29 = vperm.xlu0 %28, %v21
  %v30 = vpop.permute.xlu0 %29
  %vm32 = vcmask 72704
  %v34 = vsel %vm32, %v18, 0
  %v37 = vsel %vm32, %v19, 0
  %vm39 = vcmask 1040384
  %v41 = vsel %vm39, %v17, 0
  %43 = vmatprep.subr.mxu0 0.0
  %44 = vmatpush1.msra.mxu0 0.0
  %45 = vmatprep.subr.mxu0 0.0
  %46 = vmatpush1.msra.mxu0 0.0
  %47 = vmatprep.subr.mxu0 0.0
  %48 = vmatpush1.msra.mxu0 0.0
  %49 = vmatprep.subr.mxu0 0.0
  %50 = vmatpush1.msra.mxu0 0.0
  %51 = vmatprep.subr.mxu0 0.0
  %52 = vmatpush1.msra.mxu0 0.0
  %53 = vmatprep.subr.mxu0 0.0
  %54 = vmatpush1.msra.mxu0 0.0
  %55 = vmatprep.subr.mxu0 0.0
  %56 = vmatpush1.msra.mxu0 0.0
  %57 = vmatprep.subr.mxu0 0.0
  %58 = vmatpush1.msra.mxu0 0.0
  %59 = vmatprep.subr.mxu0 0.0
  %60 = vmatpush1.msra.mxu0 0.0
  %61 = vmatprep.subr.mxu0 0.0
  %62 = vmatpush1.msra.mxu0 0.0
  %63 = vmatprep.subr.mxu0 0.0
  %64 = vmatpush1.msra.mxu0 0.0
  %65 = vmatprep.subr.mxu0 0.0
  %66 = vmatpush1.msra.mxu0 0.0
  %67 = vmatprep.subr.mxu0 0.0
  %68 = vmatpush1.msra.mxu0 0.0
  %69 = vmatprep.subr.mxu0 0.0
  %70 = vmatpush1.msra.mxu0 0.0
  %71 = vmatprep.subr.mxu0 0.0
  %72 = vmatpush1.msra.mxu0 %v41
  %73 = vmatprep.subr.mxu0 0.0
  %74 = vmatpush1.msra.mxu0 %v16
  %75 = vmatprep.subr.mxu0 0.0
  %76 = vmatpush2.msra.mxu0 0.0
  %77 = vmatprep.subr.mxu0 0.0
  %78 = vmatpush2.msra.mxu0 0.0
  %79 = vmatprep.subr.mxu0 0.0
  %80 = vmatpush2.msra.mxu0 0.0
  %81 = vmatprep.subr.mxu0 0.0
  %82 = vmatpush2.msra.mxu0 0.0
  %83 = vmatprep.subr.mxu0 0.0
  %84 = vmatpush2.msra.mxu0 0.0
  %85 = vmatprep.subr.mxu0 0.0
  %86 = vmatpush2.msra.mxu0 0.0
  %87 = vmatprep.subr.mxu0 0.0
  %88 = vmatpush2.msra.mxu0 0.0
  %89 = vmatprep.subr.mxu0 0.0
  %90 = vmatpush2.msra.mxu0 0.0
  %91 = vmatprep.subr.mxu0 0.0
  %92 = vmatpush2.msra.mxu0 0.0
  %93 = vmatprep.subr.mxu0 0.0
  %94 = vmatpush2.msra.mxu0 0.0
  %95 = vmatprep.subr.mxu0 0.0
  %96 = vmatpush2.msra.mxu0 0.0
  %97 = vmatprep.subr.mxu0 0.0
  %98 = vmatpush2.msra.mxu0 0.0
  %99 = vmatprep.subr.mxu0 0.0
  %100 = vmatpush2.msra.mxu0 0.0
  %101 = vmatprep.subr.mxu0 0.0
  %102 = vmatpush2.msra.mxu0 0.0
  %103 = vmatprep.subr.mxu0 0.0
  %104 = vmatpush2.msra.mxu0 0.0
  %105 = vmatprep.subr.mxu0 0.0
  %106 = vmatpush2.msra.mxu0 0.0
  %107 = vmatprep.mubr.f32.mxu0 0.0
  %108 = vmatmul.mubr.f32.gmra.mxu0 %v34
  %v109 = vpop.f32.mrf.mxu0
  %v110 = vadd.f32 %v25, %v109
  %v111 = vpop.f32.mrf.mxu0
  %112 = vmatprep.mubr.f32.mxu0 0.0
  %113 = vmatmul.mubr.f32.gmra.mxu0 %v37
  %v114 = vpop.f32.mrf.mxu0
  %v115 = vadd.f32 %v30, %v114
  %v116 = vpop.f32.mrf.mxu0
  %117 = vdwg.mxu0
  %v118 = vmax.f32 %v110, 0.0
  %v119 = vmax.f32 %v115, 0.0
  %v120 = vpack.c.bf16 %v119, %v118
  %v122 = vunpack.c.l.b16 %v120
  %v123 = vunpack.c.h.b16 %v120
  %v124 = vpack.c.b16 %v122, %v122
  %v125 = vpack.c.b16 %v123, %v123
  %128 = vst [vmem:[%s3] sm:$0xf] %v124
  %129 = vst [vmem:[%s3 + $0x4] sm:$0xf] %v125
  // Predicated region
  $region14: #{denoising_autoencoder_forward.2} parent=0 // pred_check
    _
  $region15: #{denoising_autoencoder_forward.2} parent=0 // pred_check_branch
    %131 = sbr.rel (0) target = $region17
  $region16: #{denoising_autoencoder_forward.2} parent=0 // pred_region
    _
  $region17: #{denoising_autoencoder_forward.2} parent=0 // pred_fallthru
    _
  // Predicated region
  $region18: #{denoising_autoencoder_forward.2} parent=0 // pred_check
    _
  $region19: #{denoising_autoencoder_forward.2} parent=0 // pred_check_branch
    %133 = sbr.rel (0) target = $region21
  $region20: #{denoising_autoencoder_forward.2} parent=0 // pred_region
    _
  $region21: #{denoising_autoencoder_forward.2} parent=0 // pred_fallthru
    _

// kernel: denoising_autoencoder_forward.3
$region0: #{denoising_autoencoder_forward.3}
  #allocation0 [shape = 'u32[]', space=smem, size = 0x4, offset = 0x4, fixed_abs, tag = 'smem constant byte address 0x4 - core index']
  #allocation1 [shape = 'u32[144,128]{1,0:T(1,128)}', space=vmem, size = 0x12000, scoped, tag = 'internal scratch']
  %s0 = inlined_call_operand.vmem [shape: bf16[144,128], index: 0, kind: input, shape index: {}]
  %s1 = inlined_call_operand.vmem [shape: f32[112,144], index: 1, kind: input, shape index: {}]
  %s2 = inlined_call_operand.vmem [shape: f32[112,1], index: 2, kind: input, shape index: {}]
  %s3 = inlined_call_operand.vmem [shape: f32[16,128], index: 3, kind: output, shape index: {}]
  %s4 = sld [smem:[#allocation0]]
  $region22: #{denoising_autoencoder_forward.3} parent=0
    _
  %s6 = ssub.s32 1, %s4
  %s7 = scalar_select 0, %s6, %s4
  // Predicated region
  $region2: #{denoising_autoencoder_forward.3} parent=0 // pred_check
    _
  $region3: #{denoising_autoencoder_forward.3} parent=0 // pred_check_branch
    %9 = sbr.rel (0) target = $region5
  $region4: #{denoising_autoencoder_forward.3} parent=0 // pred_region
    _
  $region5: #{denoising_autoencoder_forward.3} parent=0 // pred_fallthru
    _
  // Predicated region
  $region6: #{denoising_autoencoder_forward.3} parent=0 // pred_check
    _
  $region7: #{denoising_autoencoder_forward.3} parent=0 // pred_check_branch
    %11 = sbr.rel (0) target = $region9
  $region8: #{denoising_autoencoder_forward.3} parent=0 // pred_region
    _
  $region9: #{denoising_autoencoder_forward.3} parent=0 // pred_fallthru
    _
  // Predicated region
  $region10: #{denoising_autoencoder_forward.3} parent=0 // pred_check
    _
  $region11: #{denoising_autoencoder_forward.3} parent=0 // pred_check_branch
    %13 = sbr.rel (0) target = $region13
  $region12: #{denoising_autoencoder_forward.3} parent=0 // pred_region
    _
  $region13: #{denoising_autoencoder_forward.3} parent=0 // pred_fallthru
    _
  %v14 = vld [vmem:[%s0] sm:$0xf]
  %v15 = vld [vmem:[%s0 + $0x4] sm:$0xf]
  %v16 = vld [vmem:[%s0 + $0x8] sm:$0xf]
  %v17 = vld [vmem:[%s0 + $0xc] sm:$0xf]
  %v18 = vld [vmem:[%s0 + $0x10] sm:$0xf]
  %v19 = vld [vmem:[%s0 + $0x14] sm:$0xf]
  %v20 = vld [vmem:[%s0 + $0x18] sm:$0xf]
  %v21 = vld [vmem:[%s0 + $0x1c] sm:$0xf]
  %v22 = vld [vmem:[%s0 + $0x20] sm:$0xf]
  %v23 = vld [vmem:[%s0 + $0x24] sm:$0xf]
  %v24 = vld [vmem:[%s0 + $0x28] sm:$0xf]
  %v25 = vld [vmem:[%s0 + $0x2c] sm:$0xf]
  %v26 = vld [vmem:[%s0 + $0x30] sm:$0xf]
  %v27 = vld [vmem:[%s0 + $0x34] sm:$0xf]
  %v28 = vld [vmem:[%s0 + $0x38] sm:$0xf]
  %v29 = vld [vmem:[%s0 + $0x3c] sm:$0xf]
  %v30 = vld [vmem:[%s0 + $0x40] sm:$0xf]
  %v31 = vld [vmem:[%s0 + $0x44] sm:$0xf]
  %v32 = vunpack.c.l.bf16 %v14
  %v33 = vunpack.c.l.bf16 %v15
  %v34 = vunpack.c.l.bf16 %v16
  %v35 = vunpack.c.l.bf16 %v17
  %v36 = vunpack.c.l.bf16 %v18
  %v37 = vunpack.c.l.bf16 %v19
  %v38 = vunpack.c.l.bf16 %v20
  %v39 = vunpack.c.l.bf16 %v21
  %v40 = vunpack.c.l.bf16 %v22
  %v41 = vunpack.c.l.bf16 %v23
  %v42 = vunpack.c.l.bf16 %v24
  %v43 = vunpack.c.l.bf16 %v25
  %v44 = vunpack.c.l.bf16 %v26
  %v45 = vunpack.c.l.bf16 %v27
  %v46 = vunpack.c.l.bf16 %v28
  %v47 = vunpack.c.l.bf16 %v29
  %v48 = vunpack.c.l.bf16 %v30
  %v49 = vunpack.c.l.bf16 %v31
  %v50 = vld [vmem:[%s1] sm:$0xff]
  %v51 = vld [vmem:[%s1 + $0x8] sm:$0xff]
  %v52 = vld [vmem:[%s1 + $0x10] sm:$0xff]
  %v53 = vld [vmem:[%s1 + $0x18] sm:$0xff]
  %v54 = vld [vmem:[%s1 + $0x20] sm:$0xff]
  %v55 = vld [vmem:[%s1 + $0x28] sm:$0xff]
  %v56 = vld [vmem:[%s1 + $0x30] sm:$0xff]
  %v57 = vld [vmem:[%s1 + $0x38] sm:$0xff]
  %v58 = vld [vmem:[%s2] sm:$0xff]
  %v59 = vld [vmem:[%s2 + $0x8] sm:$0xff]
  %v60 = vld [vmem:[%s2 + $0x10] sm:$0xff]
  %v61 = vld [vmem:[%s2 + $0x18] sm:$0xff]
  %63 = vset.pattern.permute.xlu0 0
  %64 = vperm.xlu0 %63, %v58
  %v65 = vpop.permute.xlu0 %64
  %68 = vset.pattern.permute.xlu0 0
  %69 = vperm.xlu0 %68, %v59
  %v70 = vpop.permute.xlu0 %69
  %73 = vset.pattern.permute.xlu0 0
  %74 = vperm.xlu0 %73, %v60
  %v75 = vpop.permute.xlu0 %74
  %78 = vset.pattern.permute.xlu0 0
  %79 = vperm.xlu0 %78, %v61
  %v80 = vpop.permute.xlu0 %79
  %vm82 = vcmask 130048
  %v84 = vsel %vm82, %v51, 0
  %v87 = vsel %vm82, %v53, 0
  %v90 = vsel %vm82, %v55, 0
  %v93 = vsel %vm82, %v57, 0
  %95 = vmatprep.subr.mxu0 0.0
  %96 = vmatpush1.msra.mxu0 %v47
  %97 = vmatprep.subr.mxu0 0.0
  %98 = vmatpush1.msra.mxu0 %v46
  %99 = vmatprep.subr.mxu0 0.0
  %100 = vmatpush1.msra.mxu0 %v45
  %101 = vmatprep.subr.mxu0 0.0
  %102 = vmatpush1.msra.mxu0 %v44
  %103 = vmatprep.subr.mxu0 0.0
  %104 = vmatpush1.msra.mxu0 %v43
  %105 = vmatprep.subr.mxu0 0.0
  %106 = vmatpush1.msra.mxu0 %v42
  %107 = vmatprep.subr.mxu0 0.0
  %108 = vmatpush1.msra.mxu0 %v41
  %109 = vmatprep.subr.mxu0 0.0
  %110 = vmatpush1.msra.mxu0 %v40
  %111 = vmatprep.subr.mxu0 0.0
  %112 = vmatpush1.msra.mxu0 %v39
  %113 = vmatprep.subr.mxu0 0.0
  %114 = vmatpush1.msra.mxu0 %v38
  %115 = vmatprep.subr.mxu0 0.0
  %116 = vmatpush1.msra.mxu0 %v37
  %117 = vmatprep.subr.mxu0 0.0
  %118 = vmatpush1.msra.mxu0 %v36
  %119 = vmatprep.subr.mxu0 0.0
  %120 = vmatpush1.msra.mxu0 %v35
  %121 = vmatprep.subr.mxu0 0.0
  %122 = vmatpush1.msra.mxu0 %v34
  %123 = vmatprep.subr.mxu0 0.0
  %124 = vmatpush1.msra.mxu0 %v33
  %125 = vmatprep.subr.mxu0 0.0
  %126 = vmatpush1.msra.mxu0 %v32
  %127 = vmatprep.subr.mxu0 0.0
  %128 = vmatpush2.msra.mxu0 0.0
  %129 = vmatprep.subr.mxu0 0.0
  %130 = vmatpush2.msra.mxu0 0.0
  %131 = vmatprep.subr.mxu0 0.0
  %132 = vmatpush2.msra.mxu0 0.0
  %133 = vmatprep.subr.mxu0 0.0
  %134 = vmatpush2.msra.mxu0 0.0
  %135 = vmatprep.subr.mxu0 0.0
  %136 = vmatpush2.msra.mxu0 0.0
  %137 = vmatprep.subr.mxu0 0.0
  %138 = vmatpush2.msra.mxu0 0.0
  %139 = vmatprep.subr.mxu0 0.0
  %140 = vmatpush2.msra.mxu0 0.0
  %141 = vmatprep.subr.mxu0 0.0
  %142 = vmatpush2.msra.mxu0 0.0
  %143 = vmatprep.subr.mxu0 0.0
  %144 = vmatpush2.msra.mxu0 0.0
  %145 = vmatprep.subr.mxu0 0.0
  %146 = vmatpush2.msra.mxu0 0.0
  %147 = vmatprep.subr.mxu0 0.0
  %148 = vmatpush2.msra.mxu0 0.0
  %149 = vmatprep.subr.mxu0 0.0
  %150 = vmatpush2.msra.mxu0 0.0
  %151 = vmatprep.subr.mxu0 0.0
  %152 = vmatpush2.msra.mxu0 0.0
  %153 = vmatprep.subr.mxu0 0.0
  %154 = vmatpush2.msra.mxu0 0.0
  %155 = vmatprep.subr.mxu0 0.0
  %156 = vmatpush2.msra.mxu0 %v49
  %157 = vmatprep.subr.mxu0 0.0
  %158 = vmatpush2.msra.mxu0 %v48
  %159 = vmatprep.mubr.f32.mxu0 %v84
  %160 = vmatmul.mubr.f32.gmra.mxu0 %v50
  %v161 = vpop.f32.mrf.mxu0
  %v162 = vadd.f32 %v65, %v161
  %v163 = vpop.f32.mrf.mxu0
  %164 = vmatprep.mubr.f32.mxu0 %v87
  %165 = vmatmul.mubr.f32.gmra.mxu0 %v52
  %v166 = vpop.f32.mrf.mxu0
  %v167 = vadd.f32 %v70, %v166
  %v168 = vpop.f32.mrf.mxu0
  %169 = vmatprep.mubr.f32.mxu0 %v90
  %170 = vmatmul.mubr.f32.gmra.mxu0 %v54
  %v171 = vpop.f32.mrf.mxu0
  %v172 = vadd.f32 %v75, %v171
  %v173 = vpop.f32.mrf.mxu0
  %174 = vmatprep.mubr.f32.mxu0 %v93
  %175 = vmatmul.mubr.f32.gmra.mxu0 %v56
  %v176 = vpop.f32.mrf.mxu0
  %v177 = vadd.f32 %v80, %v176
  %v178 = vpop.f32.mrf.mxu0
  %179 = vdwg.mxu0
  %v180 = vmax.f32 %v162, 0.0
  %v181 = vmax.f32 %v167, 0.0
  %v182 = vmax.f32 %v172, 0.0
  %v183 = vmax.f32 %v177, 0.0
  %v184 = vld [vmem:[%s1 + $0x40] sm:$0xff]
  %v185 = vld [vmem:[%s1 + $0x50] sm:$0xff]
  %v186 = vld [vmem:[%s1 + $0x60] sm:$0xff]
  %v187 = vld [vmem:[%s1 + $0x70] sm:$0xff]
  %v188 = vld [vmem:[%s1 + $0x80] sm:$0xff]
  %v189 = vld [vmem:[%s1 + $0x90] sm:$0xff]
  %v190 = vld [vmem:[%s1 + $0xa0] sm:$0xff]
  %v191 = vld [vmem:[%s1 + $0xb0] sm:$0xff]
  %v192 = vld [vmem:[%s2 + $0x20] sm:$0xff]
  %v193 = vld [vmem:[%s2 + $0x28] sm:$0xff]
  %v194 = vld [vmem:[%s2 + $0x30] sm:$0xff]
  %v195 = vld [vmem:[%s2 + $0x38] sm:$0xff]
  %v196 = vld [vmem:[%s2 + $0x40] sm:$0xff]
  %v197 = vld [vmem:[%s2 + $0x48] sm:$0xff]
  %v198 = vld [vmem:[%s2 + $0x50] sm:$0xff]
  %v199 = vld [vmem:[%s2 + $0x58] sm:$0xff]
  %201 = vset.pattern.permute.xlu0 0
  %202 = vperm.xlu0 %201, %v192
  %v203 = vpop.permute.xlu0 %202
  %206 = vset.pattern.permute.xlu0 0
  %207 = vperm.xlu0 %206, %v193
  %v208 = vpop.permute.xlu0 %207
  %211 = vset.pattern.permute.xlu0 0
  %212 = vperm.xlu0 %211, %v194
  %v213 = vpop.permute.xlu0 %212
  %216 = vset.pattern.permute.xlu0 0
  %217 = vperm.xlu0 %216, %v195
  %v218 = vpop.permute.xlu0 %217
  %221 = vset.pattern.permute.xlu0 0
  %222 = vperm.xlu0 %221, %v196
  %v223 = vpop.permute.xlu0 %222
  %226 = vset.pattern.permute.xlu0 0
  %227 = vperm.xlu0 %226, %v197
  %v228 = vpop.permute.xlu0 %227
  %231 = vset.pattern.permute.xlu0 0
  %232 = vperm.xlu0 %231, %v198
  %v233 = vpop.permute.xlu0 %232
  %236 = vset.pattern.permute.xlu0 0
  %237 = vperm.xlu0 %236, %v199
  %v238 = vpop.permute.xlu0 %237
  %vm240 = vcmask 261120
  %v242 = vsel %vm240, %v184, 0
  %v245 = vsel %vm240, %v185, 0
  %v248 = vsel %vm240, %v186, 0
  %v251 = vsel %vm240, %v187, 0
  %v254 = vsel %vm240, %v188, 0
  %v257 = vsel %vm240, %v189, 0
  %v260 = vsel %vm240, %v190, 0
  %v263 = vsel %vm240, %v191, 0
  %265 = vmatprep.subr.mxu0 0.0
  %266 = vmatpush1.msra.mxu0 0.0
  %267 = vmatprep.subr.mxu0 0.0
  %268 = vmatpush1.msra.mxu0 0.0
  %269 = vmatprep.subr.mxu0 0.0
  %270 = vmatpush1.msra.mxu0 0.0
  %271 = vmatprep.subr.mxu0 0.0
  %272 = vmatpush1.msra.mxu0 0.0
  %273 = vmatprep.subr.mxu0 0.0
  %274 = vmatpush1.msra.mxu0 0.0
  %275 = vmatprep.subr.mxu0 0.0
  %276 = vmatpush1.msra.mxu0 0.0
  %277 = vmatprep.subr.mxu0 0.0
  %278 = vmatpush1.msra.mxu0 0.0
  %279 = vmatprep.subr.mxu0 0.0
  %280 = vmatpush1.msra.mxu0 0.0
  %281 = vmatprep.subr.mxu0 0.0
  %282 = vmatpush1.msra.mxu0 0.0
  %283 = vmatprep.subr.mxu0 0.0
  %284 = vmatpush1.msra.mxu0 0.0
  %285 = vmatprep.subr.mxu0 0.0
  %286 = vmatpush1.msra.mxu0 0.0
  %287 = vmatprep.subr.mxu0 0.0
  %288 = vmatpush1.msra.mxu0 0.0
  %289 = vmatprep.subr.mxu0 0.0
  %290 = vmatpush1.msra.mxu0 %v183
  %291 = vmatprep.subr.mxu0 0.0
  %292 = vmatpush1.msra.mxu0 %v182
  %293 = vmatprep.subr.mxu0 0.0
  %294 = vmatpush1.msra.mxu0 %v181
  %295 = vmatprep.subr.mxu0 0.0
  %296 = vmatpush1.msra.mxu0 %v180
  %297 = vmatprep.subr.mxu0 0.0
  %298 = vmatpush2.msra.mxu0 0.0
  %299 = vmatprep.subr.mxu0 0.0
  %300 = vmatpush2.msra.mxu0 0.0
  %301 = vmatprep.subr.mxu0 0.0
  %302 = vmatpush2.msra.mxu0 0.0
  %303 = vmatprep.subr.mxu0 0.0
  %304 = vmatpush2.msra.mxu0 0.0
  %305 = vmatprep.subr.mxu0 0.0
  %306 = vmatpush2.msra.mxu0 0.0
  %307 = vmatprep.subr.mxu0 0.0
  %308 = vmatpush2.msra.mxu0 0.0
  %309 = vmatprep.subr.mxu0 0.0
  %310 = vmatpush2.msra.mxu0 0.0
  %311 = vmatprep.subr.mxu0 0.0
  %312 = vmatpush2.msra.mxu0 0.0
  %313 = vmatprep.subr.mxu0 0.0
  %314 = vmatpush2.msra.mxu0 0.0
  %315 = vmatprep.subr.mxu0 0.0
  %316 = vmatpush2.msra.mxu0 0.0
  %317 = vmatprep.subr.mxu0 0.0
  %318 = vmatpush2.msra.mxu0 0.0
  %319 = vmatprep.subr.mxu0 0.0
  %320 = vmatpush2.msra.mxu0 0.0
  %321 = vmatprep.subr.mxu0 0.0
  %322 = vmatpush2.msra.mxu0 0.0
  %323 = vmatprep.subr.mxu0 0.0
  %324 = vmatpush2.msra.mxu0 0.0
  %325 = vmatprep.subr.mxu0 0.0
  %326 = vmatpush2.msra.mxu0 0.0
  %327 = vmatprep.subr.mxu0 0.0
  %328 = vmatpush2.msra.mxu0 0.0
  %329 = vmatprep.mubr.f32.mxu0 0.0
  %330 = vmatmul.mubr.f32.gmra.mxu0 %v242
  %v331 = vpop.f32.mrf.mxu0
  %v332 = vadd.f32 %v203, %v331
  %v333 = vpop.f32.mrf.mxu0
  %334 = vmatprep.mubr.f32.mxu0 0.0
  %335 = vmatmul.mubr.f32.gmra.mxu0 %v245
  %v336 = vpop.f32.mrf.mxu0
  %v337 = vadd.f32 %v208, %v336
  %v338 = vpop.f32.mrf.mxu0
  %339 = vmatprep.mubr.f32.mxu0 0.0
  %340 = vmatmul.mubr.f32.gmra.mxu0 %v248
  %v341 = vpop.f32.mrf.mxu0
  %v342 = vadd.f32 %v213, %v341
  %v343 = vpop.f32.mrf.mxu0
  %344 = vmatprep.mubr.f32.mxu0 0.0
  %345 = vmatmul.mubr.f32.gmra.mxu0 %v251
  %v346 = vpop.f32.mrf.mxu0
  %v347 = vadd.f32 %v218, %v346
  %v348 = vpop.f32.mrf.mxu0
  %349 = vmatprep.mubr.f32.mxu0 0.0
  %350 = vmatmul.mubr.f32.gmra.mxu0 %v254
  %v351 = vpop.f32.mrf.mxu0
  %v352 = vadd.f32 %v223, %v351
  %v353 = vpop.f32.mrf.mxu0
  %354 = vmatprep.mubr.f32.mxu0 0.0
  %355 = vmatmul.mubr.f32.gmra.mxu0 %v257
  %v356 = vpop.f32.mrf.mxu0
  %v357 = vadd.f32 %v228, %v356
  %v358 = vpop.f32.mrf.mxu0
  %359 = vmatprep.mubr.f32.mxu0 0.0
  %360 = vmatmul.mubr.f32.gmra.mxu0 %v260
  %v361 = vpop.f32.mrf.mxu0
  %v362 = vadd.f32 %v233, %v361
  %v363 = vpop.f32.mrf.mxu0
  %364 = vmatprep.mubr.f32.mxu0 0.0
  %365 = vmatmul.mubr.f32.gmra.mxu0 %v263
  %v366 = vpop.f32.mrf.mxu0
  %v367 = vadd.f32 %v238, %v366
  %v368 = vpop.f32.mrf.mxu0
  %369 = vdwg.mxu0
  %v370 = vmax.f32 %v332, 0.0
  %v371 = vmax.f32 %v337, 0.0
  %v372 = vmax.f32 %v342, 0.0
  %v373 = vmax.f32 %v347, 0.0
  %v374 = vmax.f32 %v352, 0.0
  %v375 = vmax.f32 %v357, 0.0
  %v376 = vmax.f32 %v362, 0.0
  %v377 = vmax.f32 %v367, 0.0
  %v378 = vld [vmem:[%s1 + $0xc0] sm:$0xff]
  %v379 = vld [vmem:[%s1 + $0xd0] sm:$0xff]
  %v380 = vld [vmem:[%s2 + $0x60] sm:$0xff]
  %v381 = vld [vmem:[%s2 + $0x68] sm:$0xff]
  %383 = vset.pattern.permute.xlu0 0
  %384 = vperm.xlu0 %383, %v380
  %v385 = vpop.permute.xlu0 %384
  %388 = vset.pattern.permute.xlu0 0
  %389 = vperm.xlu0 %388, %v381
  %v390 = vpop.permute.xlu0 %389
  %vm392 = vcmask 523264
  %v394 = vsel %vm392, %v378, 0
  %v397 = vsel %vm392, %v379, 0
  %399 = vmatprep.subr.mxu0 0.0
  %400 = vmatpush1.msra.mxu0 0.0
  %401 = vmatprep.subr.mxu0 0.0
  %402 = vmatpush1.msra.mxu0 0.0
  %403 = vmatprep.subr.mxu0 0.0
  %404 = vmatpush1.msra.mxu0 0.0
  %405 = vmatprep.subr.mxu0 0.0
  %406 = vmatpush1.msra.mxu0 0.0
  %407 = vmatprep.subr.mxu0 0.0
  %408 = vmatpush1.msra.mxu0 0.0
  %409 = vmatprep.subr.mxu0 0.0
  %410 = vmatpush1.msra.mxu0 0.0
  %411 = vmatprep.subr.mxu0 0.0
  %412 = vmatpush1.msra.mxu0 0.0
  %413 = vmatprep.subr.mxu0 0.0
  %414 = vmatpush1.msra.mxu0 0.0
  %415 = vmatprep.subr.mxu0 0.0
  %416 = vmatpush1.msra.mxu0 %v377
  %417 = vmatprep.subr.mxu0 0.0
  %418 = vmatpush1.msra.mxu0 %v376
  %419 = vmatprep.subr.mxu0 0.0
  %420 = vmatpush1.msra.mxu0 %v375
  %421 = vmatprep.subr.mxu0 0.0
  %422 = vmatpush1.msra.mxu0 %v374
  %423 = vmatprep.subr.mxu0 0.0
  %424 = vmatpush1.msra.mxu0 %v373
  %425 = vmatprep.subr.mxu0 0.0
  %426 = vmatpush1.msra.mxu0 %v372
  %427 = vmatprep.subr.mxu0 0.0
  %428 = vmatpush1.msra.mxu0 %v371
  %429 = vmatprep.subr.mxu0 0.0
  %430 = vmatpush1.msra.mxu0 %v370
  %431 = vmatprep.subr.mxu0 0.0
  %432 = vmatpush2.msra.mxu0 0.0
  %433 = vmatprep.subr.mxu0 0.0
  %434 = vmatpush2.msra.mxu0 0.0
  %435 = vmatprep.subr.mxu0 0.0
  %436 = vmatpush2.msra.mxu0 0.0
  %437 = vmatprep.subr.mxu0 0.0
  %438 = vmatpush2.msra.mxu0 0.0
  %439 = vmatprep.subr.mxu0 0.0
  %440 = vmatpush2.msra.mxu0 0.0
  %441 = vmatprep.subr.mxu0 0.0
  %442 = vmatpush2.msra.mxu0 0.0
  %443 = vmatprep.subr.mxu0 0.0
  %444 = vmatpush2.msra.mxu0 0.0
  %445 = vmatprep.subr.mxu0 0.0
  %446 = vmatpush2.msra.mxu0 0.0
  %447 = vmatprep.subr.mxu0 0.0
  %448 = vmatpush2.msra.mxu0 0.0
  %449 = vmatprep.subr.mxu0 0.0
  %450 = vmatpush2.msra.mxu0 0.0
  %451 = vmatprep.subr.mxu0 0.0
  %452 = vmatpush2.msra.mxu0 0.0
  %453 = vmatprep.subr.mxu0 0.0
  %454 = vmatpush2.msra.mxu0 0.0
  %455 = vmatprep.subr.mxu0 0.0
  %456 = vmatpush2.msra.mxu0 0.0
  %457 = vmatprep.subr.mxu0 0.0
  %458 = vmatpush2.msra.mxu0 0.0
  %459 = vmatprep.subr.mxu0 0.0
  %460 = vmatpush2.msra.mxu0 0.0
  %461 = vmatprep.subr.mxu0 0.0
  %462 = vmatpush2.msra.mxu0 0.0
  %463 = vmatprep.mubr.f32.mxu0 0.0
  %464 = vmatmul.mubr.f32.gmra.mxu0 %v394
  %v465 = vpop.f32.mrf.mxu0
  %v466 = vadd.f32 %v385, %v465
  %v467 = vpop.f32.mrf.mxu0
  %468 = vmatprep.mubr.f32.mxu0 0.0
  %469 = vmatmul.mubr.f32.gmra.mxu0 %v397
  %v470 = vpop.f32.mrf.mxu0
  %v471 = vadd.f32 %v390, %v470
  %v472 = vpop.f32.mrf.mxu0
  %473 = vdwg.mxu0
  %v474 = vsub.f32 0.0, %v466
  %v475 = vsub.f32 0.0, %v471
  %v476 = vmul.f32 %v474, 1.442695
  %v477 = vpow.pop %v476
  %v478 = vmul.f32 %v475, 1.442695
  %v479 = vpow.pop %v478
  %v480 = vadd.f32 %v477, 1.0
  %v481 = vadd.f32 %v479, 1.0
  %v482 = vrcp.pop %v480
  %v483 = vmul.f32 1.0, %v482
  %v484 = vrcp.pop %v481
  %v485 = vmul.f32 1.0, %v484
  %486 = vst [vmem:[%s3] sm:$0xff] %v483
  %487 = vst [vmem:[%s3 + $0x8] sm:$0xff] %v485
  // Predicated region
  $region14: #{denoising_autoencoder_forward.3} parent=0 // pred_check
    _
  $region15: #{denoising_autoencoder_forward.3} parent=0 // pred_check_branch
    %489 = sbr.rel (0) target = $region17
  $region16: #{denoising_autoencoder_forward.3} parent=0 // pred_region
    _
  $region17: #{denoising_autoencoder_forward.3} parent=0 // pred_fallthru
    _
  // Predicated region
  $region18: #{denoising_autoencoder_forward.3} parent=0 // pred_check
    _
  $region19: #{denoising_autoencoder_forward.3} parent=0 // pred_check_branch
    %491 = sbr.rel (0) target = $region21
  $region20: #{denoising_autoencoder_forward.3} parent=0 // pred_region
    _
  $region21: #{denoising_autoencoder_forward.3} parent=0 // pred_fallthru
    _

</llo_original>
